<compile_context>
chip_gen: v7x
topology: tpu7x:2x2x1
jax: 0.10.0
libtpu: 0.0.40
codegen_flags: <defaults>
</compile_context>

<pallas_src>
import functools

import numpy as np
import jax
import jax.numpy as jnp
from jax.experimental import pallas as pl
from jax.experimental.pallas import tpu as pltpu


# ----------------------------------------------------------------------------
# Helpers / module parameters (synthetic, same shapes as the torch module)
# ----------------------------------------------------------------------------
def _round_up(x, m):
    return (x + m - 1) // m * m


def _out_channels(C, r):
    # factor==2: all branch convs output C//2 channels; factor==4: C channels.
    return C // 2 if r == 2 else C


def init_params(key, C, r):
    """Deterministic synthetic parameters with the same shapes as the torch module."""
    Co = _out_channels(C, r)
    mid_p = Co * r * r  # up_p first conv output channels (2C for r=2, 16C for r=4)
    ks = jax.random.split(key, 6)
    s = 0.2
    return dict(
        Wp1=jax.random.normal(ks[0], (mid_p, C), jnp.float32) * s,   # Conv2d(C, mid_p, 1, bias=False)
        Wp2=jax.random.normal(ks[1], (Co, Co), jnp.float32) * s,     # Conv2d(Co, Co, 1, bias=False)
        Wb1=jax.random.normal(ks[2], (C, C), jnp.float32) * s,       # Conv2d(C, C, 1) weight
        bb1=jax.random.normal(ks[3], (C,), jnp.float32) * s,         # Conv2d(C, C, 1) bias
        Wb2=jax.random.normal(ks[4], (Co, C), jnp.float32) * s,      # Conv2d(C, Co, 1, bias=False)
        Wc=jax.random.normal(ks[5], (Co, 2 * Co), jnp.float32) * s,  # final Conv2d(2Co, Co, 1, bias=False)
        a_p=jnp.float32(0.25),                                       # nn.PReLU() default init
        a_b=jnp.float32(0.25),
    )


# ----------------------------------------------------------------------------
# pltpu.roll direction probe (one tiny pallas_call, cached) — pins down the
# rotate convention so the shift amounts below are correct on any backend.
# ----------------------------------------------------------------------------
_ROLL_LIKE_JNP = None


def _roll_matches_jnp():
    """True iff pltpu.roll(x, s, axis) behaves like jnp.roll(x, s, axis)."""
    global _ROLL_LIKE_JNP
    if _ROLL_LIKE_JNP is None:
        def probe(x_ref, o_ref):
            o_ref[...] = pltpu.roll(x_ref[...], 1, axis=1)

        x = jnp.broadcast_to(jnp.arange(256, dtype=jnp.float32)[None, :], (8, 256))
        y = pl.pallas_call(probe, out_shape=jax.ShapeDtypeStruct((8, 256), jnp.float32))(x)
        _ROLL_LIKE_JNP = bool(np.asarray(y)[0, 1] == 0.0)  # jnp.roll puts x[0] at index 1
    return _ROLL_LIKE_JNP


# ----------------------------------------------------------------------------
# Kernel: one (batch, H-tile) per grid step; activations as (C, L) with the
# padded flattened spatial axis on lanes.  L = round_up((TH+2)*W, 128), laid
# out as [TH tile rows | bottom halo row | zero pad | top halo row].
# ----------------------------------------------------------------------------
def _dual_upsample_kernel(x_ref, wf_ref, bb1_ref, wbc_ref, wpc_ref, ch_ref,
                          prelu_ref, o_ref,
                          *, r, C, CB, SUBP, TW, a_wm, a_wp, a_hm, a_hp):
    # x_ref:   (1, 1, C, L)            bf16 activations (tile rows + halos + pad)
    # wf_ref:  (CB + r^2*SUBP, C)      fused [up_b conv1 ; all up_p sub-pixel convs]
    # bb1_ref: (C, 1)                  up_b conv1 bias (f32)
    # wbc_ref: (Co, C)                 folded Wc[:, Co:] @ Wb2
    # wpc_ref: (Co, SUBP)              folded Wc[:, :Co] @ Wp2 (zero-padded cols)
    # ch_ref:  (r, L)                  per-position horizontal neighbour weights
    # o_ref:   (1, 1, r*r, Co, TW)     bf16 output sub-pixel planes for this tile
    x = x_ref[0, 0]                                  # (C, L)
    a_p = prelu_ref[0]
    a_b = prelu_ref[1]
    cdt = x.dtype

    # Both branches' first 1x1 convs in a single MXU pass over x.
    y_all = jnp.dot(wf_ref[...], x, preferred_element_type=jnp.float32)   # (CB + r^2*SUBP, L)

    # --- up_b trunk: bias + PReLU + folded (Wc_b @ Wb2) conv, over all rows incl. halos ---
    y2 = y_all[:C] + bb1_ref[...]
    y2 = jnp.where(y2 > 0, y2, a_b * y2)
    zz = jnp.dot(wbc_ref[...], y2.astype(cdt), preferred_element_type=jnp.float32)   # (Co, L)

    # --- up_p trunk: PReLU on the fused r^2 sub-pixel convs; halo/pad columns dropped ---
    yp = y_all[CB:, :TW]
    yp = jnp.where(yp > 0, yp, a_p * yp).astype(cdt)                                  # (r^2*SUBP, TW)

    wpc = wpc_ref[...]
    ch_all = ch_ref[...]                                                              # (r, L)

    # Horizontal +-1 neighbours (wrap-around at image column edges is killed by the
    # zero entries of ch; row-boundary wrap positions are exactly those columns).
    zz_l = pltpu.roll(zz, a_wm, axis=1)              # value at p == zz[p - 1]
    zz_r = pltpu.roll(zz, a_wp, axis=1)              # value at p == zz[p + 1]

    for j in range(r):                               # horizontal sub-pixel phase
        f_j = (j + 0.5) / r - 0.5
        zz_n = zz_l if f_j < 0 else zz_r
        cj = ch_all[j:j + 1]                         # (1, L) neighbour weight
        hz = zz + cj * (zz_n - zz)                   # W-direction interp (1-mul form)
        hz_u = pltpu.roll(hz, a_hm, axis=1)          # value at p == hz[p - W] (row above / top halo)
        hz_d = pltpu.roll(hz, a_hp, axis=1)          # value at p == hz[p + W] (row below / bottom halo)
        hz_c = hz[:, :TW]
        hz_um = hz_u[:, :TW]
        hz_dm = hz_d[:, :TW]
        for i in range(r):                           # vertical sub-pixel phase
            f_i = (i + 0.5) / r - 0.5
            hz_n = hz_um if f_i < 0 else hz_dm
            x_b = hz_c + abs(f_i) * (hz_n - hz_c)    # H-direction interp (clamped halo row), (Co, TW)
            s = i * r + j
            x_p = jnp.dot(wpc, yp[s * SUBP:(s + 1) * SUBP],
                          preferred_element_type=jnp.float32)
            o_ref[0, 0, s] = (x_p + x_b).astype(o_ref.dtype)


# ----------------------------------------------------------------------------
# Tile-height auto-selection from a VMEM budget
# ----------------------------------------------------------------------------
def _pick_tile_h(H, W, C, Co, r, CB, SUBP, budget_bytes):
    n_rows = CB + r * r * SUBP
    best = 1
    for th in range(1, H + 1):
        if H % th:
            continue
        L = _round_up((th + 2) * W, 128)
        tw = th * W
        blocks = 2 * (C * L * 2 + r * r * Co * tw * 2)                  # double-buffered in/out blocks
        consts = 2 * ((n_rows * C + Co * C + Co * SUBP) * 2 + 8 * L * 4 + 4096)
        interm = n_rows * L * 4 + r * r * SUBP * tw * 2 + 12 * max(Co, 8) * L * 4
        if blocks + consts + interm <= budget_bytes:
            best = th
    return best


# ----------------------------------------------------------------------------
# Wrapper: layout + algebraic weight folding (plain JAX / numpy glue)
# ----------------------------------------------------------------------------
def dual_upsample(x_nchw, params, r, *, tile_h=None, matmul_dtype=jnp.bfloat16,
                  out_dtype=jnp.bfloat16, vmem_budget_bytes=12 * 2**20):
    B, C, H, W = x_nchw.shape
    Co = _out_channels(C, r)
    CB = _round_up(max(C, 1), 16)        # bf16 sublane-tile aligned row group for up_b conv1
    SUBP = _round_up(max(Co, 1), 16)     # aligned per-sub-pixel row group for up_p

    if tile_h is None:
        tile_h = _pick_tile_h(H, W, C, Co, r, CB, SUBP, vmem_budget_bytes)
    TH = int(tile_h)
    assert H % TH == 0, f"tile_h={TH} must divide H={H}"
    n_ht = H // TH
    TW = TH * W
    L_body = (TH + 2) * W
    L = _round_up(L_body, 128)

    # ---- input tiles with clamped vertical halo rows ----
    # per-tile lane layout: [TH tile rows | bottom halo row | zero pad | top halo row]
    x_pad = jnp.concatenate([x_nchw[:, :, :1], x_nchw, x_nchw[:, :, -1:]], axis=2)   # (B, C, H+2, W)
    row_sel = np.concatenate([np.arange(1, TH + 1), [TH + 1], [0]])                  # within a tile, +1 pad offset
    rows = np.arange(n_ht)[:, None] * TH + row_sel[None, :]                          # (n_ht, TH+2) into H+2 axis
    xt = x_pad[:, :, rows, :]                                                        # (B, C, n_ht, TH+2, W)
    xt = jnp.transpose(xt, (0, 2, 1, 3, 4)).astype(matmul_dtype)                     # (B, n_ht, C, TH+2, W)
    main = xt[:, :, :, :TH + 1, :].reshape(B, n_ht, C, (TH + 1) * W)                 # tile rows + bottom halo
    top = xt[:, :, :, TH + 1, :]                                                     # (B, n_ht, C, W) top halo
    lane_pad = jnp.zeros((B, n_ht, C, L - L_body), matmul_dtype)
    x_tiles = jnp.concatenate([main, lane_pad, top], axis=-1)                        # (B, n_ht, C, L)

    # ---- folded / fused weights ----
    f32 = jnp.float32
    # PixelShuffle fold: sub-pixel s = i*r + j, group row co <- Wp1 row co*r^2 + s; padded to SUBP rows.
    rows_p = (np.arange(Co)[None, :] * (r * r) + np.arange(r * r)[:, None]).reshape(-1)
    wp1_g = params["Wp1"][rows_p].reshape(r * r, Co, C)
    wp1_pad = jnp.zeros((r * r, SUBP, C), f32).at[:, :Co, :].set(wp1_g).reshape(r * r * SUBP, C)
    wb1_pad = jnp.zeros((CB, C), f32).at[:C, :].set(params["Wb1"])
    wfused = jnp.concatenate([wb1_pad, wp1_pad], axis=0).astype(matmul_dtype)        # (CB + r^2*SUBP, C)

    wpc = jnp.zeros((Co, SUBP), f32).at[:, :Co].set(
        params["Wc"][:, :Co] @ params["Wp2"]).astype(matmul_dtype)                   # (Co, SUBP)
    wbc = (params["Wc"][:, Co:] @ params["Wb2"]).astype(matmul_dtype)                # (Co, C)
    bb1 = params["bb1"].reshape(C, 1).astype(f32)
    prelu = jnp.stack([params["a_p"], params["a_b"]]).astype(f32)                    # (2,) -> SMEM

    # ---- horizontal neighbour-weight table (r, L); zero at clamped image columns ----
    col = np.zeros(L, np.int64)
    col[:(TH + 1) * W] = np.arange((TH + 1) * W) % W      # tile rows + bottom halo
    col[L - W:] = np.arange(W)                            # top halo row (pad lanes: don't care)
    ch = np.zeros((r, L), np.float32)
    for j in range(r):
        f = (j + 0.5) / r - 0.5
        bcol = 0 if f < 0 else W - 1
        ch[j] = np.where(col == bcol, 0.0, abs(f))
    ch = jnp.asarray(ch)

    # ---- pltpu.roll direction + shift amounts realizing result[p] = v[(p + off) % L] ----
    like_jnp = _roll_matches_jnp()

    def amt(off):
        return (-off) % L if like_jnp else off % L

    kernel = functools.partial(
        _dual_upsample_kernel, r=r, C=C, CB=CB, SUBP=SUBP, TW=TW,
        a_wm=amt(-1), a_wp=amt(+1), a_hm=amt(-W), a_hp=amt(+W))

    n_rows = CB + r * r * SUBP
    flops = int(2 * B * n_ht * (n_rows * C * L + Co * C * L + r * r * Co * SUBP * TW)
                + 10 * B * n_ht * r * r * Co * TW)
    bytes_accessed = int(B * n_ht * (C * L + r * r * Co * TW) * 2
                         + (n_rows * C + Co * C + Co * SUBP) * 2 + r * L * 4 + (C + 2) * 4)

    in_block = C * L * 2
    out_block = r * r * Co * TW * 2
    const_bytes = (n_rows * C + Co * C + Co * SUBP) * 2 + 8 * L * 4 + 8 * 128 * 4
    interm = n_rows * L * 4 + r * r * SUBP * TW * 2 + 12 * max(Co, 8) * L * 4
    vmem_limit = int(min(max(2 * (in_block + out_block + const_bytes) + 2 * interm,
                             16 * 2**20), 56 * 2**20))

    out = pl.pallas_call(
        kernel,
        out_shape=jax.ShapeDtypeStruct((B, n_ht, r * r, Co, TW), out_dtype),
        grid_spec=pltpu.PrefetchScalarGridSpec(
            num_scalar_prefetch=0,
            grid=(B, n_ht),
            in_specs=[
                pl.BlockSpec((1, 1, C, L), lambda b, t: (b, t, 0, 0)),
                pl.BlockSpec((n_rows, C), lambda b, t: (0, 0)),
                pl.BlockSpec((C, 1), lambda b, t: (0, 0)),
                pl.BlockSpec((Co, C), lambda b, t: (0, 0)),
                pl.BlockSpec((Co, SUBP), lambda b, t: (0, 0)),
                pl.BlockSpec((r, L), lambda b, t: (0, 0)),
                pl.BlockSpec(memory_space=pltpu.MemorySpace.SMEM),
            ],
            out_specs=pl.BlockSpec((1, 1, r * r, Co, TW), lambda b, t: (b, t, 0, 0, 0)),
        ),
        compiler_params=pltpu.CompilerParams(
            dimension_semantics=("parallel", "parallel"),
            vmem_limit_bytes=vmem_limit),
        cost_estimate=pl.CostEstimate(flops=flops, transcendentals=0,
                                      bytes_accessed=bytes_accessed),
    )(x_tiles, wfused, bb1, wbc, wpc, ch, prelu)

    # Interleave sub-pixel planes back to full resolution (on bf16), NCHW f32 out.
    out = out.reshape(B, n_ht, r, r, Co, TH, W)                  # (B, t, i, j, co, h, w)
    out = jnp.transpose(out, (0, 4, 1, 5, 2, 6, 3)).reshape(B, Co, r * H, r * W)
    return out.astype(jnp.float32)


# ----------------------------------------------------------------------------
# Pure-JAX reference mirroring the torch forward (NCHW), for correctness check
# ----------------------------------------------------------------------------
def _bilinear_matrix(in_size, out_size):
    """Row-interpolation matrix matching nn.Upsample(mode='bilinear', align_corners=False)."""
    scale = in_size / out_size
    M = np.zeros((out_size, in_size), dtype=np.float32)
    for d in range(out_size):
        src = max((d + 0.5) * scale - 0.5, 0.0)
        i0 = min(int(np.floor(src)), in_size - 1)
        i1 = min(i0 + 1, in_size - 1)
        lam = src - i0
        M[d, i0] += 1.0 - lam
        M[d, i1] += lam
    return M


def reference(x, params, r):
    B, C, H, W = x.shape
    Co = _out_channels(C, r)

    def prelu(v, a):
        return jnp.where(v > 0, v, a * v)

    # up_p
    y1 = prelu(jnp.einsum('oc,bchw->bohw', params["Wp1"], x), params["a_p"])
    y1 = y1.reshape(B, Co, r, r, H, W).transpose(0, 1, 4, 2, 5, 3).reshape(B, Co, r * H, r * W)
    x_p = jnp.einsum('oc,bchw->bohw', params["Wp2"], y1)
    # up_b
    y2 = prelu(jnp.einsum('oc,bchw->bohw', params["Wb1"], x)
               + params["bb1"][None, :, None, None], params["a_b"])
    L = jnp.asarray(_bilinear_matrix(H, r * H))
    R = jnp.asarray(_bilinear_matrix(W, r * W))
    u = jnp.einsum('ph,bchw,qw->bcpq', L, y2, R)
    x_b = jnp.einsum('oc,bchw->bohw', params["Wb2"], u)
    # final conv on concat
    cat = jnp.concatenate([x_p, x_b], axis=1)
    return jnp.einsum('oc,bchw->bohw', params["Wc"], cat)


if __name__ == "__main__":
    cases = [
        (2, (2, 4, 16, 16), 8),      # factor 2, two H-tiles (exercises cross-tile halos)
        (2, (1, 4, 16, 16), 4),      # factor 2, four H-tiles (more halo seams, short tiles)
        (4, (1, 4, 16, 16), None),   # factor 4, auto tile height (single tile)
    ]
    for factor, (B, C, H, W), th in cases:
        key = jax.random.PRNGKey(0)
        kx, kp = jax.random.split(key)
        x = jax.random.normal(kx, (B, C, H, W), jnp.float32)
        params = init_params(kp, C, factor)

        out = jax.block_until_ready(dual_upsample(x, params, factor, tile_h=th))
        Co = _out_channels(C, factor)
        assert out.shape == (B, Co, factor * H, factor * W), out.shape

        ref = jax.block_until_ready(reference(x, params, factor))
        # bf16 matmul operands and bf16 kernel output (f32 accumulation) -> modest tolerance.
        if not np.allclose(np.asarray(out), np.asarray(ref), atol=2.5e-2, rtol=2.5e-2):
            max_err = float(jnp.max(jnp.abs(out - ref)))
            raise AssertionError(
                f"factor={factor}, tile_h={th}: Pallas kernel mismatch vs reference, "
                f"max |err| = {max_err}")
    print("KERNEL_OK")
</pallas_src>

<mosaic_0001>
module attributes {stable_mosaic.version = 11 : i64} {
  func.func @probe(%arg0: memref<8x256xf32, #tpu.memory_space<vmem>>, %arg1: memref<8x256xf32, #tpu.memory_space<vmem>>) attributes {dimension_semantics = [], scalar_prefetch = 0 : i64, scratch_operands = 0 : i64, tpu.core_type = #tpu.core_type<tc>} {
    %c0 = arith.constant 0 : index
    %c0_0 = arith.constant 0 : index
    %0 = vector.load %arg0[%c0, %c0_0] : memref<8x256xf32, #tpu.memory_space<vmem>>, vector<8x256xf32>
    %c1_i32 = arith.constant 1 : i32
    %1 = tpu.dynamic_rotate %0 by %c1_i32 dim 1 : vector<8x256xf32>, i32 -> vector<8x256xf32>
    %c0_1 = arith.constant 0 : index
    %c0_2 = arith.constant 0 : index
    %2 = vector.load %arg1[%c0_1, %c0_2] : memref<8x256xf32, #tpu.memory_space<vmem>>, vector<8x256xf32>
    tpu.vector_store %arg1[%c0_1, %c0_2], %1 {strides = array<i32>} : memref<8x256xf32, #tpu.memory_space<vmem>>, vector<8x256xf32>,
    return
  }
}

</mosaic_0001>

<llo_original>
// kernel: tpu_custom_call.1
$region0: #{tpu_custom_call.1}
  #allocation0 [shape = 'u32[]', space=smem, size = 0x4, offset = 0x4, fixed_abs, tag = 'smem constant byte address 0x4 - core index']
  #allocation1 [shape = 'u32[144,128]{1,0:T(1,128)}', space=vmem, size = 0x12000, scoped, tag = 'internal scratch']
  %s0 = inlined_call_operand.hbm [shape: f32[8,256], index: 0, kind: input, shape index: {}]
  %s1 = inlined_call_operand.hbm [shape: f32[8,256], index: 1, kind: output, shape index: {}]
  %s2 = sld [smem:[#allocation0]]
  $region18: #{tpu_custom_call.1} parent=0
    _
  %s4 = ssub.s32 1, %s2
  %s5 = scalar_select 0, %s4, %s2
  $region1: #{tpu_custom_call.1} parent=0
    #allocation2 [shape = 'u8[8192]{0}', space=vmem, size = 0x2000, scoped, tag = 'input window, operand 0, single buffered']
    #allocation3 [shape = 's32[1]{0}', space=sflag, size = 0x4, scoped, tag = 'scoped memory for tpu_custom_call.1']
    #allocation4 [shape = 's32[1]{0}', space=sflag, size = 0x4, scoped, tag = 'scoped memory for tpu_custom_call.1']
    #allocation5 [shape = 'u8[8192]{0}', space=vmem, size = 0x2000, scoped, tag = 'output window, operand 0, single buffered']
    %6 = vsyncpa [#allocation3], 0
    %7 = vsyncpa [#allocation4], 0
    // Predicated region
    $region2: #{tpu_custom_call.1} parent=1 // pred_check
      _
    $region3: #{tpu_custom_call.1} parent=1 // pred_check_branch
      %9 = sbr.rel (0) target = $region5
    $region4: #{tpu_custom_call.1} parent=1 // pred_region
      %s11 = ssub.s32 256, 256
      %12 = vsyncadd [#allocation3], %s11
      %s14 = sshll.u32 [#allocation2], 4
      %s15 = int_to_ptr.vmem [resolvable:$true] %s14
      %17 = dma.hbm_to_vmem [thread:$0]  %s0, 256, %s15, [#allocation3]
    $region5: #{tpu_custom_call.1} parent=1 // pred_fallthru
      _
    // Predicated region
    $region6: #{tpu_custom_call.1} parent=1 // pred_check
      _
    $region7: #{tpu_custom_call.1} parent=1 // pred_check_branch
      %19 = sbr.rel (0) target = $region9
    $region8: #{tpu_custom_call.1} parent=1 // pred_region
      %20 = dma.done [#allocation3], 256
    $region9: #{tpu_custom_call.1} parent=1 // pred_fallthru
      _
    %v21 = vld [vmem:[#allocation2] sm:$0xff]
    %v22 = vld [vmem:[#allocation2 + $0x8] sm:$0xff]
    %23 = vrot.lane.b32.xlu0 %v21, 1
    %v24 = vpop.permute.xlu0 %23
    %25 = vrot.lane.b32.xlu0 %v22, 1
    %v26 = vpop.permute.xlu0 %25
    %v27 = vlaneseq
    %v28 = vand.u32 %v27, 127
    %vm29 = vcmp.lt.s32.totalorder %v28, 1
    %v30 = vsel %vm29, %v24, %v26
    %v31 = vsel %vm29, %v26, %v24
    %32 = vst [vmem:[#allocation5] sm:$0xff] %v31
    %33 = vst [vmem:[#allocation5 + $0x8] sm:$0xff] %v30
    // Predicated region
    $region10: #{tpu_custom_call.1} parent=1 // pred_check
      _
    $region11: #{tpu_custom_call.1} parent=1 // pred_check_branch
      %35 = sbr.rel (0) target = $region13
    $region12: #{tpu_custom_call.1} parent=1 // pred_region
      %s37 = ssub.s32 256, 256
      %38 = vsyncadd [#allocation4], %s37
      %s40 = sshll.u32 [#allocation5], 4
      %s41 = int_to_ptr.vmem [resolvable:$true] %s40
      %43 = dma.vmem_to_hbm [thread:$0]  %s41, 256, %s1, [#allocation4]
    $region13: #{tpu_custom_call.1} parent=1 // pred_fallthru
      _
    // Predicated region
    $region14: #{tpu_custom_call.1} parent=1 // pred_check
      _
    $region15: #{tpu_custom_call.1} parent=1 // pred_check_branch
      %45 = sbr.rel (0) target = $region17
    $region16: #{tpu_custom_call.1} parent=1 // pred_region
      %46 = dma.done [#allocation4], 256
    $region17: #{tpu_custom_call.1} parent=1 // pred_fallthru
      _
    %47 = vsyncpa [#allocation3], 1
    %48 = vsyncpa [#allocation4], 1

</llo_original>
